<compile_context>
chip_gen: v5e
topology: v5e:2x2
jax: 0.10.0
libtpu: 0.0.40
codegen_flags: <defaults>
</compile_context>

<pallas_src>
import jax
import jax.numpy as jnp
from jax.experimental import pallas as pl
from jax.experimental.pallas import tpu as pltpu


def lstm_classifier_forward(input_sentence, params):
    """input_sentence: (batch, seq) int32 token ids -> (batch, output_size) logits."""
    emb_table = params["embedding"]           # (vocab, emb)
    w_ih = params["w_ih"]                     # (4H, emb)   PyTorch layout
    w_hh = params["w_hh"]                     # (4H, H)
    b_ih = params["b_ih"]                     # (4H,)
    b_hh = params["b_hh"]                     # (4H,)
    w_label = params["w_label"]               # (out, H)
    b_label = params["b_label"]               # (out,)

    batch, seq = input_sentence.shape
    emb = emb_table.shape[1]
    hidden = w_hh.shape[1]
    out_size = w_label.shape[0]
    out_pad = ((out_size + 127) // 128) * 128   # lane-dense padded logits width

    # Glue (XLA side): embedding lookup, time-major permute, flatten to 2D so
    # the kernel's hoisted input projection is a single plain 2D matmul.
    x = jnp.take(emb_table, input_sentence, axis=0)         # (batch, seq, emb)
    x = jnp.transpose(x, (1, 0, 2)).astype(jnp.float32)     # (seq, batch, emb)
    x2d = x.reshape(seq * batch, emb)                        # rows [t*B:(t+1)*B] = step t

    # Pre-transpose weights so the kernel does row-major matmuls; fold biases.
    wih_t = w_ih.T.astype(jnp.float32)                       # (emb, 4H)
    whh_t = w_hh.T.astype(jnp.float32)                       # (H, 4H)
    bias = (b_ih + b_hh).reshape(1, 4 * hidden).astype(jnp.float32)
    wlab_t = jnp.pad(w_label.T.astype(jnp.float32),
                     ((0, 0), (0, out_pad - out_size)))      # (H, out_pad)
    blab = jnp.pad(b_label.astype(jnp.float32),
                   (0, out_pad - out_size)).reshape(1, out_pad)

    H = hidden

    def kernel(x_ref, wih_ref, whh_ref, b_ref, wlab_ref, blab_ref, out_ref):
        # --- hoisted input projection: one MXU call for all timesteps ---
        xproj = (jnp.dot(x_ref[...], wih_ref[...],
                         preferred_element_type=jnp.float32)
                 + b_ref[...])                               # (seq*batch, 4H)

        # Lane mask selecting the g-gate (cell candidate) lanes; hoisted.
        lane = jax.lax.broadcasted_iota(jnp.int32, (batch, 4 * H), 1)
        g_mask = (lane >= 2 * H) & (lane < 3 * H)

        whh = whh_ref[...]                                   # (H, 4H), loop-invariant

        h = jnp.zeros((batch, H), jnp.float32)
        c = jnp.zeros((batch, H), jnp.float32)

        # Statically-unrolled serial time loop (seq is small & static).
        for t in range(seq):
            gates = (xproj[t * batch:(t + 1) * batch, :]
                     + jnp.dot(h, whh, preferred_element_type=jnp.float32))
            # Full-vreg activations (EUP slot); one VPU select picks tanh lanes
            # for the g-gate, sigmoid elsewhere (PyTorch order: i, f, g, o).
            acts = jnp.where(g_mask, jnp.tanh(gates), jax.nn.sigmoid(gates))
            i_g = acts[:, 0 * H:1 * H]
            f_g = acts[:, 1 * H:2 * H]
            g_g = acts[:, 2 * H:3 * H]
            o_g = acts[:, 3 * H:4 * H]
            c = f_g * c + i_g * g_g
            h = o_g * jnp.tanh(c)

        # Fused classifier head on the final hidden state (lane-dense store).
        logits = (jnp.dot(h, wlab_ref[...], preferred_element_type=jnp.float32)
                  + blab_ref[...])
        out_ref[...] = logits.astype(out_ref.dtype)

    out_padded = pl.pallas_call(
        kernel,
        out_shape=jax.ShapeDtypeStruct((batch, out_pad), jnp.float32),
        in_specs=[pl.BlockSpec(memory_space=pltpu.MemorySpace.VMEM)] * 6,
        out_specs=pl.BlockSpec(memory_space=pltpu.MemorySpace.VMEM),
    )(x2d, wih_t, whh_t, bias, wlab_t, blab)

    return out_padded[:, :out_size]


def reference_forward(input_sentence, params):
    """Pure-JAX reference matching PyTorch LSTM semantics (sanity check)."""
    emb_table = params["embedding"]
    w_ih, w_hh = params["w_ih"], params["w_hh"]
    b = params["b_ih"] + params["b_hh"]
    w_label, b_label = params["w_label"], params["b_label"]
    hidden = w_hh.shape[1]

    x = jnp.take(emb_table, input_sentence, axis=0)       # (batch, seq, emb)
    x = jnp.transpose(x, (1, 0, 2))                        # (seq, batch, emb)
    batch = x.shape[1]
    h = jnp.zeros((batch, hidden), jnp.float32)
    c = jnp.zeros((batch, hidden), jnp.float32)

    def step(carry, x_t):
        h, c = carry
        gates = x_t @ w_ih.T + h @ w_hh.T + b
        i_g = jax.nn.sigmoid(gates[:, 0 * hidden:1 * hidden])
        f_g = jax.nn.sigmoid(gates[:, 1 * hidden:2 * hidden])
        g_g = jnp.tanh(gates[:, 2 * hidden:3 * hidden])
        o_g = jax.nn.sigmoid(gates[:, 3 * hidden:4 * hidden])
        c = f_g * c + i_g * g_g
        h = o_g * jnp.tanh(c)
        return (h, c), None

    (h, c), _ = jax.lax.scan(step, (h, c), x)
    return h @ w_label.T + b_label


def init_params(key, vocab_size, embedding_length, hidden_size, output_size):
    ks = jax.random.split(key, 7)
    scale = 0.1
    return {
        "embedding": jax.random.normal(ks[0], (vocab_size, embedding_length), jnp.float32) * scale,
        "w_ih":      jax.random.normal(ks[1], (4 * hidden_size, embedding_length), jnp.float32) * scale,
        "w_hh":      jax.random.normal(ks[2], (4 * hidden_size, hidden_size), jnp.float32) * scale,
        "b_ih":      jax.random.normal(ks[3], (4 * hidden_size,), jnp.float32) * scale,
        "b_hh":      jax.random.normal(ks[4], (4 * hidden_size,), jnp.float32) * scale,
        "w_label":   jax.random.normal(ks[5], (output_size, hidden_size), jnp.float32) * scale,
        "b_label":   jax.random.normal(ks[6], (output_size,), jnp.float32) * scale,
    }


if __name__ == "__main__":
    # Small shapes consistent with the module's forward.
    batch, seq = 2, 8
    vocab_size, embedding_length, hidden_size, output_size = 50, 16, 32, 8

    key = jax.random.PRNGKey(0)
    pkey, ikey = jax.random.split(key)
    params = init_params(pkey, vocab_size, embedding_length, hidden_size, output_size)

    input_sentence = jax.random.randint(ikey, (batch, seq), 0, vocab_size, dtype=jnp.int32)

    out = lstm_classifier_forward(input_sentence, params)
    out = jax.block_until_ready(out)

    ref = jax.block_until_ready(reference_forward(input_sentence, params))
    assert out.shape == (batch, output_size)
    assert jnp.max(jnp.abs(out - ref)) < 1e-4

    print("KERNEL_OK")
</pallas_src>

<mosaic_0001>
module attributes {stable_mosaic.version = 11 : i64} {
  func.func @kernel(%arg0: memref<16x16xf32, #tpu.memory_space<vmem>>, %arg1: memref<16x128xf32, #tpu.memory_space<vmem>>, %arg2: memref<32x128xf32, #tpu.memory_space<vmem>>, %arg3: memref<1x128xf32, #tpu.memory_space<vmem>>, %arg4: memref<32x128xf32, #tpu.memory_space<vmem>>, %arg5: memref<1x128xf32, #tpu.memory_space<vmem>>, %arg6: memref<2x128xf32, #tpu.memory_space<vmem>>) attributes {dimension_semantics = [], scalar_prefetch = 0 : i64, scratch_operands = 0 : i64, tpu.core_type = #tpu.core_type<tc>} {
    %c0 = arith.constant 0 : index
    %c0_0 = arith.constant 0 : index
    %0 = vector.load %arg0[%c0, %c0_0] : memref<16x16xf32, #tpu.memory_space<vmem>>, vector<16x16xf32>
    %c0_1 = arith.constant 0 : index
    %c0_2 = arith.constant 0 : index
    %1 = vector.load %arg1[%c0_1, %c0_2] : memref<16x128xf32, #tpu.memory_space<vmem>>, vector<16x128xf32>
    %cst = arith.constant dense<0.000000e+00> : vector<16x128xf32>
    %2 = tpu.matmul %0, %1, %cst {dimension_numbers = #tpu.dot_dimension_numbers<[1], [0], [0], [1], [0, 0, 1, 1], [], []>} : vector<16x16xf32>, vector<16x128xf32>, vector<16x128xf32> -> vector<16x128xf32>
    %c0_3 = arith.constant 0 : index
    %c0_4 = arith.constant 0 : index
    %3 = vector.load %arg3[%c0_3, %c0_4] : memref<1x128xf32, #tpu.memory_space<vmem>>, vector<1x128xf32>
    %4 = vector.broadcast %3 : vector<1x128xf32> to vector<16x128xf32>
    %5 = arith.addf %2, %4 : vector<16x128xf32>
    %6 = tpu.iota {dimensions = array<i32: 1>} : vector<2x128xi32>
    %c64_i32 = arith.constant 64 : i32
    %7 = vector.broadcast %c64_i32 : i32 to vector<2x128xi32>
    %8 = arith.cmpi sge, %6, %7 : vector<2x128xi32>
    %c96_i32 = arith.constant 96 : i32
    %9 = vector.broadcast %c96_i32 : i32 to vector<2x128xi32>
    %10 = arith.cmpi slt, %6, %9 : vector<2x128xi32>
    %11 = arith.andi %8, %10 : vector<2x128xi1>
    %c0_5 = arith.constant 0 : index
    %c0_6 = arith.constant 0 : index
    %12 = vector.load %arg2[%c0_5, %c0_6] : memref<32x128xf32, #tpu.memory_space<vmem>>, vector<32x128xf32>
    %cst_7 = arith.constant 0.000000e+00 : f32
    %13 = vector.broadcast %cst_7 : f32 to vector<2x32xf32>
    %cst_8 = arith.constant 0.000000e+00 : f32
    %14 = vector.broadcast %cst_8 : f32 to vector<2x32xf32>
    %15 = vector.extract_strided_slice %5 {offsets = [0, 0], sizes = [2, 128], strides = [1, 1]} : vector<16x128xf32> to vector<2x128xf32>
    %cst_9 = arith.constant dense<0.000000e+00> : vector<2x128xf32>
    %16 = tpu.matmul %13, %12, %cst_9 {dimension_numbers = #tpu.dot_dimension_numbers<[1], [0], [0], [1], [0, 0, 1, 1], [], []>} : vector<2x32xf32>, vector<32x128xf32>, vector<2x128xf32> -> vector<2x128xf32>
    %17 = arith.addf %15, %16 : vector<2x128xf32>
    %18 = math.tanh %17 : vector<2x128xf32>
    %19 = arith.negf %17 : vector<2x128xf32>
    %20 = math.exp %19 : vector<2x128xf32>
    %cst_10 = arith.constant 1.000000e+00 : f32
    %21 = vector.broadcast %cst_10 : f32 to vector<2x128xf32>
    %22 = arith.addf %21, %20 : vector<2x128xf32>
    %23 = arith.divf %21, %22 : vector<2x128xf32>
    %24 = arith.select %11, %18, %23 : vector<2x128xi1>, vector<2x128xf32>
    %25 = vector.extract_strided_slice %24 {offsets = [0, 0], sizes = [2, 32], strides = [1, 1]} : vector<2x128xf32> to vector<2x32xf32>
    %26 = vector.extract_strided_slice %24 {offsets = [0, 32], sizes = [2, 32], strides = [1, 1]} : vector<2x128xf32> to vector<2x32xf32>
    %27 = vector.extract_strided_slice %24 {offsets = [0, 64], sizes = [2, 32], strides = [1, 1]} : vector<2x128xf32> to vector<2x32xf32>
    %28 = vector.extract_strided_slice %24 {offsets = [0, 96], sizes = [2, 32], strides = [1, 1]} : vector<2x128xf32> to vector<2x32xf32>
    %29 = arith.mulf %26, %14 : vector<2x32xf32>
    %30 = arith.mulf %25, %27 : vector<2x32xf32>
    %31 = arith.addf %29, %30 : vector<2x32xf32>
    %32 = math.tanh %31 : vector<2x32xf32>
    %33 = arith.mulf %28, %32 : vector<2x32xf32>
    %34 = vector.extract_strided_slice %5 {offsets = [2, 0], sizes = [2, 128], strides = [1, 1]} : vector<16x128xf32> to vector<2x128xf32>
    %cst_11 = arith.constant dense<0.000000e+00> : vector<2x128xf32>
    %35 = tpu.matmul %33, %12, %cst_11 {dimension_numbers = #tpu.dot_dimension_numbers<[1], [0], [0], [1], [0, 0, 1, 1], [], []>} : vector<2x32xf32>, vector<32x128xf32>, vector<2x128xf32> -> vector<2x128xf32>
    %36 = arith.addf %34, %35 : vector<2x128xf32>
    %37 = math.tanh %36 : vector<2x128xf32>
    %38 = arith.negf %36 : vector<2x128xf32>
    %39 = math.exp %38 : vector<2x128xf32>
    %cst_12 = arith.constant 1.000000e+00 : f32
    %40 = vector.broadcast %cst_12 : f32 to vector<2x128xf32>
    %41 = arith.addf %40, %39 : vector<2x128xf32>
    %42 = arith.divf %40, %41 : vector<2x128xf32>
    %43 = arith.select %11, %37, %42 : vector<2x128xi1>, vector<2x128xf32>
    %44 = vector.extract_strided_slice %43 {offsets = [0, 0], sizes = [2, 32], strides = [1, 1]} : vector<2x128xf32> to vector<2x32xf32>
    %45 = vector.extract_strided_slice %43 {offsets = [0, 32], sizes = [2, 32], strides = [1, 1]} : vector<2x128xf32> to vector<2x32xf32>
    %46 = vector.extract_strided_slice %43 {offsets = [0, 64], sizes = [2, 32], strides = [1, 1]} : vector<2x128xf32> to vector<2x32xf32>
    %47 = vector.extract_strided_slice %43 {offsets = [0, 96], sizes = [2, 32], strides = [1, 1]} : vector<2x128xf32> to vector<2x32xf32>
    %48 = arith.mulf %45, %31 : vector<2x32xf32>
    %49 = arith.mulf %44, %46 : vector<2x32xf32>
    %50 = arith.addf %48, %49 : vector<2x32xf32>
    %51 = math.tanh %50 : vector<2x32xf32>
    %52 = arith.mulf %47, %51 : vector<2x32xf32>
    %53 = vector.extract_strided_slice %5 {offsets = [4, 0], sizes = [2, 128], strides = [1, 1]} : vector<16x128xf32> to vector<2x128xf32>
    %cst_13 = arith.constant dense<0.000000e+00> : vector<2x128xf32>
    %54 = tpu.matmul %52, %12, %cst_13 {dimension_numbers = #tpu.dot_dimension_numbers<[1], [0], [0], [1], [0, 0, 1, 1], [], []>} : vector<2x32xf32>, vector<32x128xf32>, vector<2x128xf32> -> vector<2x128xf32>
    %55 = arith.addf %53, %54 : vector<2x128xf32>
    %56 = math.tanh %55 : vector<2x128xf32>
    %57 = arith.negf %55 : vector<2x128xf32>
    %58 = math.exp %57 : vector<2x128xf32>
    %cst_14 = arith.constant 1.000000e+00 : f32
    %59 = vector.broadcast %cst_14 : f32 to vector<2x128xf32>
    %60 = arith.addf %59, %58 : vector<2x128xf32>
    %61 = arith.divf %59, %60 : vector<2x128xf32>
    %62 = arith.select %11, %56, %61 : vector<2x128xi1>, vector<2x128xf32>
    %63 = vector.extract_strided_slice %62 {offsets = [0, 0], sizes = [2, 32], strides = [1, 1]} : vector<2x128xf32> to vector<2x32xf32>
    %64 = vector.extract_strided_slice %62 {offsets = [0, 32], sizes = [2, 32], strides = [1, 1]} : vector<2x128xf32> to vector<2x32xf32>
    %65 = vector.extract_strided_slice %62 {offsets = [0, 64], sizes = [2, 32], strides = [1, 1]} : vector<2x128xf32> to vector<2x32xf32>
    %66 = vector.extract_strided_slice %62 {offsets = [0, 96], sizes = [2, 32], strides = [1, 1]} : vector<2x128xf32> to vector<2x32xf32>
    %67 = arith.mulf %64, %50 : vector<2x32xf32>
    %68 = arith.mulf %63, %65 : vector<2x32xf32>
    %69 = arith.addf %67, %68 : vector<2x32xf32>
    %70 = math.tanh %69 : vector<2x32xf32>
    %71 = arith.mulf %66, %70 : vector<2x32xf32>
    %72 = vector.extract_strided_slice %5 {offsets = [6, 0], sizes = [2, 128], strides = [1, 1]} : vector<16x128xf32> to vector<2x128xf32>
    %cst_15 = arith.constant dense<0.000000e+00> : vector<2x128xf32>
    %73 = tpu.matmul %71, %12, %cst_15 {dimension_numbers = #tpu.dot_dimension_numbers<[1], [0], [0], [1], [0, 0, 1, 1], [], []>} : vector<2x32xf32>, vector<32x128xf32>, vector<2x128xf32> -> vector<2x128xf32>
    %74 = arith.addf %72, %73 : vector<2x128xf32>
    %75 = math.tanh %74 : vector<2x128xf32>
    %76 = arith.negf %74 : vector<2x128xf32>
    %77 = math.exp %76 : vector<2x128xf32>
    %cst_16 = arith.constant 1.000000e+00 : f32
    %78 = vector.broadcast %cst_16 : f32 to vector<2x128xf32>
    %79 = arith.addf %78, %77 : vector<2x128xf32>
    %80 = arith.divf %78, %79 : vector<2x128xf32>
    %81 = arith.select %11, %75, %80 : vector<2x128xi1>, vector<2x128xf32>
    %82 = vector.extract_strided_slice %81 {offsets = [0, 0], sizes = [2, 32], strides = [1, 1]} : vector<2x128xf32> to vector<2x32xf32>
    %83 = vector.extract_strided_slice %81 {offsets = [0, 32], sizes = [2, 32], strides = [1, 1]} : vector<2x128xf32> to vector<2x32xf32>
    %84 = vector.extract_strided_slice %81 {offsets = [0, 64], sizes = [2, 32], strides = [1, 1]} : vector<2x128xf32> to vector<2x32xf32>
    %85 = vector.extract_strided_slice %81 {offsets = [0, 96], sizes = [2, 32], strides = [1, 1]} : vector<2x128xf32> to vector<2x32xf32>
    %86 = arith.mulf %83, %69 : vector<2x32xf32>
    %87 = arith.mulf %82, %84 : vector<2x32xf32>
    %88 = arith.addf %86, %87 : vector<2x32xf32>
    %89 = math.tanh %88 : vector<2x32xf32>
    %90 = arith.mulf %85, %89 : vector<2x32xf32>
    %91 = vector.extract_strided_slice %5 {offsets = [8, 0], sizes = [2, 128], strides = [1, 1]} : vector<16x128xf32> to vector<2x128xf32>
    %cst_17 = arith.constant dense<0.000000e+00> : vector<2x128xf32>
    %92 = tpu.matmul %90, %12, %cst_17 {dimension_numbers = #tpu.dot_dimension_numbers<[1], [0], [0], [1], [0, 0, 1, 1], [], []>} : vector<2x32xf32>, vector<32x128xf32>, vector<2x128xf32> -> vector<2x128xf32>
    %93 = arith.addf %91, %92 : vector<2x128xf32>
    %94 = math.tanh %93 : vector<2x128xf32>
    %95 = arith.negf %93 : vector<2x128xf32>
    %96 = math.exp %95 : vector<2x128xf32>
    %cst_18 = arith.constant 1.000000e+00 : f32
    %97 = vector.broadcast %cst_18 : f32 to vector<2x128xf32>
    %98 = arith.addf %97, %96 : vector<2x128xf32>
    %99 = arith.divf %97, %98 : vector<2x128xf32>
    %100 = arith.select %11, %94, %99 : vector<2x128xi1>, vector<2x128xf32>
    %101 = vector.extract_strided_slice %100 {offsets = [0, 0], sizes = [2, 32], strides = [1, 1]} : vector<2x128xf32> to vector<2x32xf32>
    %102 = vector.extract_strided_slice %100 {offsets = [0, 32], sizes = [2, 32], strides = [1, 1]} : vector<2x128xf32> to vector<2x32xf32>
    %103 = vector.extract_strided_slice %100 {offsets = [0, 64], sizes = [2, 32], strides = [1, 1]} : vector<2x128xf32> to vector<2x32xf32>
    %104 = vector.extract_strided_slice %100 {offsets = [0, 96], sizes = [2, 32], strides = [1, 1]} : vector<2x128xf32> to vector<2x32xf32>
    %105 = arith.mulf %102, %88 : vector<2x32xf32>
    %106 = arith.mulf %101, %103 : vector<2x32xf32>
    %107 = arith.addf %105, %106 : vector<2x32xf32>
    %108 = math.tanh %107 : vector<2x32xf32>
    %109 = arith.mulf %104, %108 : vector<2x32xf32>
    %110 = vector.extract_strided_slice %5 {offsets = [10, 0], sizes = [2, 128], strides = [1, 1]} : vector<16x128xf32> to vector<2x128xf32>
    %cst_19 = arith.constant dense<0.000000e+00> : vector<2x128xf32>
    %111 = tpu.matmul %109, %12, %cst_19 {dimension_numbers = #tpu.dot_dimension_numbers<[1], [0], [0], [1], [0, 0, 1, 1], [], []>} : vector<2x32xf32>, vector<32x128xf32>, vector<2x128xf32> -> vector<2x128xf32>
    %112 = arith.addf %110, %111 : vector<2x128xf32>
    %113 = math.tanh %112 : vector<2x128xf32>
    %114 = arith.negf %112 : vector<2x128xf32>
    %115 = math.exp %114 : vector<2x128xf32>
    %cst_20 = arith.constant 1.000000e+00 : f32
    %116 = vector.broadcast %cst_20 : f32 to vector<2x128xf32>
    %117 = arith.addf %116, %115 : vector<2x128xf32>
    %118 = arith.divf %116, %117 : vector<2x128xf32>
    %119 = arith.select %11, %113, %118 : vector<2x128xi1>, vector<2x128xf32>
    %120 = vector.extract_strided_slice %119 {offsets = [0, 0], sizes = [2, 32], strides = [1, 1]} : vector<2x128xf32> to vector<2x32xf32>
    %121 = vector.extract_strided_slice %119 {offsets = [0, 32], sizes = [2, 32], strides = [1, 1]} : vector<2x128xf32> to vector<2x32xf32>
    %122 = vector.extract_strided_slice %119 {offsets = [0, 64], sizes = [2, 32], strides = [1, 1]} : vector<2x128xf32> to vector<2x32xf32>
    %123 = vector.extract_strided_slice %119 {offsets = [0, 96], sizes = [2, 32], strides = [1, 1]} : vector<2x128xf32> to vector<2x32xf32>
    %124 = arith.mulf %121, %107 : vector<2x32xf32>
    %125 = arith.mulf %120, %122 : vector<2x32xf32>
    %126 = arith.addf %124, %125 : vector<2x32xf32>
    %127 = math.tanh %126 : vector<2x32xf32>
    %128 = arith.mulf %123, %127 : vector<2x32xf32>
    %129 = vector.extract_strided_slice %5 {offsets = [12, 0], sizes = [2, 128], strides = [1, 1]} : vector<16x128xf32> to vector<2x128xf32>
    %cst_21 = arith.constant dense<0.000000e+00> : vector<2x128xf32>
    %130 = tpu.matmul %128, %12, %cst_21 {dimension_numbers = #tpu.dot_dimension_numbers<[1], [0], [0], [1], [0, 0, 1, 1], [], []>} : vector<2x32xf32>, vector<32x128xf32>, vector<2x128xf32> -> vector<2x128xf32>
    %131 = arith.addf %129, %130 : vector<2x128xf32>
    %132 = math.tanh %131 : vector<2x128xf32>
    %133 = arith.negf %131 : vector<2x128xf32>
    %134 = math.exp %133 : vector<2x128xf32>
    %cst_22 = arith.constant 1.000000e+00 : f32
    %135 = vector.broadcast %cst_22 : f32 to vector<2x128xf32>
    %136 = arith.addf %135, %134 : vector<2x128xf32>
    %137 = arith.divf %135, %136 : vector<2x128xf32>
    %138 = arith.select %11, %132, %137 : vector<2x128xi1>, vector<2x128xf32>
    %139 = vector.extract_strided_slice %138 {offsets = [0, 0], sizes = [2, 32], strides = [1, 1]} : vector<2x128xf32> to vector<2x32xf32>
    %140 = vector.extract_strided_slice %138 {offsets = [0, 32], sizes = [2, 32], strides = [1, 1]} : vector<2x128xf32> to vector<2x32xf32>
    %141 = vector.extract_strided_slice %138 {offsets = [0, 64], sizes = [2, 32], strides = [1, 1]} : vector<2x128xf32> to vector<2x32xf32>
    %142 = vector.extract_strided_slice %138 {offsets = [0, 96], sizes = [2, 32], strides = [1, 1]} : vector<2x128xf32> to vector<2x32xf32>
    %143 = arith.mulf %140, %126 : vector<2x32xf32>
    %144 = arith.mulf %139, %141 : vector<2x32xf32>
    %145 = arith.addf %143, %144 : vector<2x32xf32>
    %146 = math.tanh %145 : vector<2x32xf32>
    %147 = arith.mulf %142, %146 : vector<2x32xf32>
    %148 = vector.extract_strided_slice %5 {offsets = [14, 0], sizes = [2, 128], strides = [1, 1]} : vector<16x128xf32> to vector<2x128xf32>
    %cst_23 = arith.constant dense<0.000000e+00> : vector<2x128xf32>
    %149 = tpu.matmul %147, %12, %cst_23 {dimension_numbers = #tpu.dot_dimension_numbers<[1], [0], [0], [1], [0, 0, 1, 1], [], []>} : vector<2x32xf32>, vector<32x128xf32>, vector<2x128xf32> -> vector<2x128xf32>
    %150 = arith.addf %148, %149 : vector<2x128xf32>
    %151 = math.tanh %150 : vector<2x128xf32>
    %152 = arith.negf %150 : vector<2x128xf32>
    %153 = math.exp %152 : vector<2x128xf32>
    %cst_24 = arith.constant 1.000000e+00 : f32
    %154 = vector.broadcast %cst_24 : f32 to vector<2x128xf32>
    %155 = arith.addf %154, %153 : vector<2x128xf32>
    %156 = arith.divf %154, %155 : vector<2x128xf32>
    %157 = arith.select %11, %151, %156 : vector<2x128xi1>, vector<2x128xf32>
    %158 = vector.extract_strided_slice %157 {offsets = [0, 0], sizes = [2, 32], strides = [1, 1]} : vector<2x128xf32> to vector<2x32xf32>
    %159 = vector.extract_strided_slice %157 {offsets = [0, 32], sizes = [2, 32], strides = [1, 1]} : vector<2x128xf32> to vector<2x32xf32>
    %160 = vector.extract_strided_slice %157 {offsets = [0, 64], sizes = [2, 32], strides = [1, 1]} : vector<2x128xf32> to vector<2x32xf32>
    %161 = vector.extract_strided_slice %157 {offsets = [0, 96], sizes = [2, 32], strides = [1, 1]} : vector<2x128xf32> to vector<2x32xf32>
    %162 = arith.mulf %159, %145 : vector<2x32xf32>
    %163 = arith.mulf %158, %160 : vector<2x32xf32>
    %164 = arith.addf %162, %163 : vector<2x32xf32>
    %165 = math.tanh %164 : vector<2x32xf32>
    %166 = arith.mulf %161, %165 : vector<2x32xf32>
    %c0_25 = arith.constant 0 : index
    %c0_26 = arith.constant 0 : index
    %167 = vector.load %arg4[%c0_25, %c0_26] : memref<32x128xf32, #tpu.memory_space<vmem>>, vector<32x128xf32>
    %cst_27 = arith.constant dense<0.000000e+00> : vector<2x128xf32>
    %168 = tpu.matmul %166, %167, %cst_27 {dimension_numbers = #tpu.dot_dimension_numbers<[1], [0], [0], [1], [0, 0, 1, 1], [], []>} : vector<2x32xf32>, vector<32x128xf32>, vector<2x128xf32> -> vector<2x128xf32>
    %c0_28 = arith.constant 0 : index
    %c0_29 = arith.constant 0 : index
    %169 = vector.load %arg5[%c0_28, %c0_29] : memref<1x128xf32, #tpu.memory_space<vmem>>, vector<1x128xf32>
    %170 = vector.broadcast %169 : vector<1x128xf32> to vector<2x128xf32>
    %171 = arith.addf %168, %170 : vector<2x128xf32>
    %c0_30 = arith.constant 0 : index
    %c0_31 = arith.constant 0 : index
    %172 = vector.load %arg6[%c0_30, %c0_31] : memref<2x128xf32, #tpu.memory_space<vmem>>, vector<2x128xf32>
    tpu.vector_store %arg6[%c0_30, %c0_31], %171 {strides = array<i32>} : memref<2x128xf32, #tpu.memory_space<vmem>>, vector<2x128xf32>,
    return
  }
}

</mosaic_0001>

<llo_original>
// kernel: tpu_custom_call.1
$region0: #{tpu_custom_call.1}
  #allocation0 [shape = 'u32[]', space=smem, size = 0x4, offset = 0x4, fixed_abs, tag = 'smem constant byte address 0x4 - core index']
  #allocation1 [shape = 'u32[72,128]{1,0:T(1,128)}', space=vmem, size = 0x9000, scoped, tag = 'internal scratch']
  %s0 = inlined_call_operand.hbm [shape: f32[16,16], index: 0, kind: input, shape index: {}]
  %s1 = inlined_call_operand.hbm [shape: f32[16,128], index: 1, kind: input, shape index: {}]
  %s2 = inlined_call_operand.hbm [shape: f32[32,128], index: 2, kind: input, shape index: {}]
  %s3 = inlined_call_operand.vmem [shape: f32[1,128], index: 3, kind: input, shape index: {}]
  %s4 = inlined_call_operand.hbm [shape: f32[32,128], index: 4, kind: input, shape index: {}]
  %s5 = inlined_call_operand.vmem [shape: f32[1,128], index: 5, kind: input, shape index: {}]
  %s6 = inlined_call_operand.hbm [shape: f32[2,128], index: 6, kind: output, shape index: {}]
  %s7 = sld [smem:[#allocation0]]
  $region50: #{tpu_custom_call.1} parent=0
    _
  %s9 = ssub.s32 1, %s7
  %s10 = scalar_select 0, %s9, %s7
  $region1: #{tpu_custom_call.1} parent=0
    #allocation2 [shape = 'u8[8192]{0}', space=vmem, size = 0x2000, scoped, tag = 'input window, operand 0, single buffered']
    #allocation3 [shape = 's32[1]{0}', space=sflag, size = 0x4, scoped, tag = 'scoped memory for tpu_custom_call.1']
    #allocation4 [shape = 's32[1]{0}', space=sflag, size = 0x4, scoped, tag = 'scoped memory for tpu_custom_call.1']
    #allocation5 [shape = 'u8[8192]{0}', space=vmem, size = 0x2000, scoped, tag = 'input window, operand 1, single buffered']
    #allocation6 [shape = 's32[1]{0}', space=sflag, size = 0x4, scoped, tag = 'scoped memory for tpu_custom_call.1']
    #allocation7 [shape = 'u8[16384]{0}', space=vmem, size = 0x4000, scoped, tag = 'input window, operand 2, single buffered']
    #allocation8 [shape = 'u8[16384]{0}', space=vmem, size = 0x4000, scoped, tag = 'input window, operand 4, single buffered']
    #allocation9 [shape = 's32[1]{0}', space=sflag, size = 0x4, scoped, tag = 'scoped memory for tpu_custom_call.1']
    #allocation10 [shape = 'u8[1024]{0}', space=vmem, size = 0x400, scoped, tag = 'output window, operand 0, single buffered']
    %11 = vsyncpa [#allocation3], 0
    %12 = vsyncpa [#allocation6], 0
    %13 = vsyncpa [#allocation9], 0
    %14 = vsyncpa [#allocation4], 0
    // Predicated region
    $region2: #{tpu_custom_call.1} parent=1 // pred_check
      _
    $region3: #{tpu_custom_call.1} parent=1 // pred_check_branch
      %16 = sbr.rel (0) target = $region5
    $region4: #{tpu_custom_call.1} parent=1 // pred_region
      %18 = vsyncadd [#allocation3], 0
      %s19 = sshll.u32 %s0, 4
      %s20 = int_to_ptr.hbm [resolvable:$true] %s19
      %s21 = sshll.u32 [#allocation2], 4
      %s22 = int_to_ptr.vmem [resolvable:$true] %s21
      %27 = dma.hbm_to_vmem [thread:$0]  %s20, 256, %s22, [#allocation3], 128, 128, 8
    $region5: #{tpu_custom_call.1} parent=1 // pred_fallthru
      _
    // Predicated region
    $region6: #{tpu_custom_call.1} parent=1 // pred_check
      _
    $region7: #{tpu_custom_call.1} parent=1 // pred_check_branch
      %29 = sbr.rel (0) target = $region9
    $region8: #{tpu_custom_call.1} parent=1 // pred_region
      %31 = vsyncadd [#allocation6], 0
      %s32 = sshll.u32 %s1, 4
      %s33 = int_to_ptr.hbm [resolvable:$true] %s32
      %s34 = sshll.u32 [#allocation5], 4
      %s35 = int_to_ptr.vmem [resolvable:$true] %s34
      %40 = dma.hbm_to_vmem [thread:$0]  %s33, 256, %s35, [#allocation6], 128, 128, 8
    $region9: #{tpu_custom_call.1} parent=1 // pred_fallthru
      _
    // Predicated region
    $region10: #{tpu_custom_call.1} parent=1 // pred_check
      _
    $region11: #{tpu_custom_call.1} parent=1 // pred_check_branch
      %42 = sbr.rel (0) target = $region13
    $region12: #{tpu_custom_call.1} parent=1 // pred_region
      %44 = vsyncadd [#allocation6], 0
      %s45 = sshll.u32 %s2, 4
      %s46 = int_to_ptr.hbm [resolvable:$true] %s45
      %s47 = sshll.u32 [#allocation7], 4
      %s48 = int_to_ptr.vmem [resolvable:$true] %s47
      %53 = dma.hbm_to_vmem [thread:$0]  %s46, 512, %s48, [#allocation6], 128, 128, 8
    $region13: #{tpu_custom_call.1} parent=1 // pred_fallthru
      _
    // Predicated region
    $region14: #{tpu_custom_call.1} parent=1 // pred_check
      _
    $region15: #{tpu_custom_call.1} parent=1 // pred_check_branch
      %55 = sbr.rel (0) target = $region17
    $region16: #{tpu_custom_call.1} parent=1 // pred_region
      _
    $region17: #{tpu_custom_call.1} parent=1 // pred_fallthru
      _
    // Predicated region
    $region18: #{tpu_custom_call.1} parent=1 // pred_check
      _
    $region19: #{tpu_custom_call.1} parent=1 // pred_check_branch
      %57 = sbr.rel (0) target = $region21
    $region20: #{tpu_custom_call.1} parent=1 // pred_region
      %59 = vsyncadd [#allocation9], 0
      %s60 = sshll.u32 %s4, 4
      %s61 = int_to_ptr.hbm [resolvable:$true] %s60
      %s62 = sshll.u32 [#allocation8], 4
      %s63 = int_to_ptr.vmem [resolvable:$true] %s62
      %68 = dma.hbm_to_vmem [thread:$0]  %s61, 512, %s63, [#allocation9], 128, 128, 8
    $region21: #{tpu_custom_call.1} parent=1 // pred_fallthru
      _
    // Predicated region
    $region22: #{tpu_custom_call.1} parent=1 // pred_check
      _
    $region23: #{tpu_custom_call.1} parent=1 // pred_check_branch
      %70 = sbr.rel (0) target = $region25
    $region24: #{tpu_custom_call.1} parent=1 // pred_region
      _
    $region25: #{tpu_custom_call.1} parent=1 // pred_fallthru
      _
    // Predicated region
    $region26: #{tpu_custom_call.1} parent=1 // pred_check
      _
    $region27: #{tpu_custom_call.1} parent=1 // pred_check_branch
      %72 = sbr.rel (0) target = $region29
    $region28: #{tpu_custom_call.1} parent=1 // pred_region
      %74 = dma.done [#allocation3], 256
    $region29: #{tpu_custom_call.1} parent=1 // pred_fallthru
      _
    // Predicated region
    $region30: #{tpu_custom_call.1} parent=1 // pred_check
      _
    $region31: #{tpu_custom_call.1} parent=1 // pred_check_branch
      %76 = sbr.rel (0) target = $region33
    $region32: #{tpu_custom_call.1} parent=1 // pred_region
      %78 = dma.done [#allocation6], 256
    $region33: #{tpu_custom_call.1} parent=1 // pred_fallthru
      _
    // Predicated region
    $region34: #{tpu_custom_call.1} parent=1 // pred_check
      _
    $region35: #{tpu_custom_call.1} parent=1 // pred_check_branch
      %80 = sbr.rel (0) target = $region37
    $region36: #{tpu_custom_call.1} parent=1 // pred_region
      %82 = dma.done [#allocation6], 512
    $region37: #{tpu_custom_call.1} parent=1 // pred_fallthru
      _
    // Predicated region
    $region38: #{tpu_custom_call.1} parent=1 // pred_check
      _
    $region39: #{tpu_custom_call.1} parent=1 // pred_check_branch
      %84 = sbr.rel (0) target = $region41
    $region40: #{tpu_custom_call.1} parent=1 // pred_region
      %86 = dma.done [#allocation9], 512
    $region41: #{tpu_custom_call.1} parent=1 // pred_fallthru
      _
    %v87 = vld [vmem:[#allocation2] sm:$0xff]
    %v88 = vld [vmem:[#allocation2 + $0x8] sm:$0xff]
    %v89 = vld [vmem:[#allocation5] sm:$0xff]
    %v90 = vld [vmem:[#allocation5 + $0x8] sm:$0xff]
    %v91 = vld [vmem:[%s3] sm:$0x1]
    %v93 = vperm.slane %v91, 0
    %vm95 = vcmask 130048
    %v97 = vsel %vm95, %v87, 0
    %v100 = vsel %vm95, %v88, 0
    %102 = vmatpush.msra.mxu0 0.0
    %103 = vmatpush.msra.mxu0 0.0
    %104 = vmatpush.msra.mxu0 0.0
    %105 = vmatpush.msra.mxu0 0.0
    %106 = vmatpush.msra.mxu0 0.0
    %107 = vmatpush.msra.mxu0 0.0
    %108 = vmatpush.msra.mxu0 0.0
    %109 = vmatpush.msra.mxu0 0.0
    %110 = vmatpush.msra.mxu0 0.0
    %111 = vmatpush.msra.mxu0 0.0
    %112 = vmatpush.msra.mxu0 0.0
    %113 = vmatpush.msra.mxu0 0.0
    %114 = vmatpush.msra.mxu0 0.0
    %115 = vmatpush.msra.mxu0 0.0
    %116 = vmatpush.msra.mxu0 %v90
    %117 = vmatpush.msra.mxu0 %v89
    %118 = vmatmul.f32.gmra.mxu0 %v97
    %v119 = vpop.f32.mrf.mxu0
    %v120 = vadd.f32 %v93, %v119
    %121 = vmatmul.f32.gmra.mxu0 %v100
    %v122 = vpop.f32.mrf.mxu0
    %v123 = vadd.f32 %v93, %v122
    %124 = vdwg.mxu0
    %v125 = vlaneseq
    %v126 = vand.u32 %v125, 127
    %vm127 = vcmp.ge.s32.totalorder %v126, 64
    %vm128 = vcmp.lt.s32.totalorder %v126, 96
    %vm129 = vmand %vm127, %vm128
    %v130 = vld [vmem:[#allocation7] sm:$0xff]
    %v131 = vld [vmem:[#allocation7 + $0x8] sm:$0xff]
    %v132 = vld [vmem:[#allocation7 + $0x10] sm:$0xff]
    %v133 = vld [vmem:[#allocation7 + $0x18] sm:$0xff]
    %vm134 = vcmask 261120
    %v136 = vsel %vm134, 0.0, 0
    %138 = vmatpush.msra.mxu0 0.0
    %139 = vmatpush.msra.mxu0 0.0
    %140 = vmatpush.msra.mxu0 0.0
    %141 = vmatpush.msra.mxu0 0.0
    %142 = vmatpush.msra.mxu0 0.0
    %143 = vmatpush.msra.mxu0 0.0
    %144 = vmatpush.msra.mxu0 0.0
    %145 = vmatpush.msra.mxu0 0.0
    %146 = vmatpush.msra.mxu0 0.0
    %147 = vmatpush.msra.mxu0 0.0
    %148 = vmatpush.msra.mxu0 0.0
    %149 = vmatpush.msra.mxu0 0.0
    %150 = vmatpush.msra.mxu0 %v133
    %151 = vmatpush.msra.mxu0 %v132
    %152 = vmatpush.msra.mxu0 %v131
    %153 = vmatpush.msra.mxu0 %v130
    %154 = vmatmul.f32.gmra.mxu0 %v136
    %v155 = vpop.f32.mrf.mxu0
    %v156 = vadd.f32 0.0, %v155
    %157 = vdwg.mxu0
    %v158 = vadd.f32 %v120, %v156
    %v159 = vtanh.pop %v158
    %v160 = vxor.u32 %v158, 2147483648
    %v161 = vmul.f32 %v160, 1.442695
    %v162 = vpow.pop %v161
    %v163 = vadd.f32 %v162, 1.0
    %v164 = vrcp.pop %v163
    %v165 = vmul.f32 %v163, %v164
    %v166 = vsub.f32 1.0, %v165
    %v167 = vmul.f32 %v164, %v166
    %v168 = vadd.f32 %v164, %v167
    %vm169 = vweird.f32 %v163
    %vm170 = vweird.f32 %v164
    %vm171 = vmor %vm169, %vm170
    %v172 = vsel %vm171, %v164, %v168
    %v173 = vand.u32 2147483647, %v163
    %vm174 = vcmp.eq.f32.partialorder %v173, 8.507059e+37
    %v175 = vand.u32 %v163, 2147483648
    %v176 = vor.u32 1.1754944e-38, %v175
    %v177 = vsel %vm174, %v176, %v172
    %v178 = vmul.f32 1.0, %v177
    %v179 = vsel %vm129, %v159, %v178
    %v180 = vmul.f32 %v179, 0.0
    %182 = vrot.lane.b32.xlu0 %v179, 64
    %v183 = vpop.permute.xlu0 %182
    %v185 = vmul.f32 %v179, %v183
    %187 = vrot.lane.b32.xlu0 %v185, 32
    %v188 = vpop.permute.xlu0 %187
    %v190 = vadd.f32 %v180, %v188
    %v191 = vtanh.pop %v190
    %193 = vrot.lane.b32.xlu0 %v191, 64
    %v194 = vpop.permute.xlu0 %193
    %v196 = vmul.f32 %v179, %v194
    %198 = vrot.lane.b32.xlu0 %v196, 32
    %v199 = vpop.permute.xlu0 %198
    %v200 = vsel %vm134, %v199, 0
    %202 = vmatpush.msra.mxu0 0.0
    %203 = vmatpush.msra.mxu0 0.0
    %204 = vmatpush.msra.mxu0 0.0
    %205 = vmatpush.msra.mxu0 0.0
    %206 = vmatpush.msra.mxu0 0.0
    %207 = vmatpush.msra.mxu0 0.0
    %208 = vmatpush.msra.mxu0 0.0
    %209 = vmatpush.msra.mxu0 0.0
    %210 = vmatpush.msra.mxu0 0.0
    %211 = vmatpush.msra.mxu0 0.0
    %212 = vmatpush.msra.mxu0 0.0
    %213 = vmatpush.msra.mxu0 0.0
    %214 = vmatpush.msra.mxu0 %v133
    %215 = vmatpush.msra.mxu0 %v132
    %216 = vmatpush.msra.mxu0 %v131
    %217 = vmatpush.msra.mxu0 %v130
    %218 = vmatmul.f32.gmra.mxu0 %v200
    %v219 = vpop.f32.mrf.mxu0
    %v220 = vadd.f32 0.0, %v219
    %221 = vdwg.mxu0
    %v223 = vrot.slane %v220, 6
    %v225 = vadd.f32 %v120, %v223
    %v226 = vtanh.pop %v225
    %v227 = vxor.u32 %v225, 2147483648
    %v228 = vmul.f32 %v227, 1.442695
    %v229 = vpow.pop %v228
    %v230 = vadd.f32 %v229, 1.0
    %v231 = vrcp.pop %v230
    %v232 = vmul.f32 %v230, %v231
    %v233 = vsub.f32 1.0, %v232
    %v234 = vmul.f32 %v231, %v233
    %v235 = vadd.f32 %v231, %v234
    %vm236 = vweird.f32 %v230
    %vm237 = vweird.f32 %v231
    %vm238 = vmor %vm236, %vm237
    %v239 = vsel %vm238, %v231, %v235
    %v240 = vand.u32 2147483647, %v230
    %vm241 = vcmp.eq.f32.partialorder %v240, 8.507059e+37
    %v242 = vand.u32 %v230, 2147483648
    %v243 = vor.u32 1.1754944e-38, %v242
    %v244 = vsel %vm241, %v243, %v239
    %v245 = vmul.f32 1.0, %v244
    %v246 = vsel %vm129, %v226, %v245
    %v248 = vrot.slane %v190, 6
    %v250 = vmul.f32 %v246, %v248
    %252 = vrot.lane.b32.xlu0 %v246, 64
    %v253 = vpop.permute.xlu0 %252
    %v255 = vmul.f32 %v246, %v253
    %257 = vrot.lane.b32.xlu0 %v255, 32
    %v258 = vpop.permute.xlu0 %257
    %v260 = vadd.f32 %v250, %v258
    %v261 = vtanh.pop %v260
    %263 = vrot.lane.b32.xlu0 %v261, 64
    %v264 = vpop.permute.xlu0 %263
    %v266 = vmul.f32 %v246, %v264
    %v268 = vrot.slane %v266, 2
    %269 = vrot.lane.b32.xlu0 %v268, 32
    %v270 = vpop.permute.xlu0 %269
    %v271 = vsel %vm134, %v270, 0
    %273 = vmatpush.msra.mxu0 0.0
    %274 = vmatpush.msra.mxu0 0.0
    %275 = vmatpush.msra.mxu0 0.0
    %276 = vmatpush.msra.mxu0 0.0
    %277 = vmatpush.msra.mxu0 0.0
    %278 = vmatpush.msra.mxu0 0.0
    %279 = vmatpush.msra.mxu0 0.0
    %280 = vmatpush.msra.mxu0 0.0
    %281 = vmatpush.msra.mxu0 0.0
    %282 = vmatpush.msra.mxu0 0.0
    %283 = vmatpush.msra.mxu0 0.0
    %284 = vmatpush.msra.mxu0 0.0
    %285 = vmatpush.msra.mxu0 %v133
    %286 = vmatpush.msra.mxu0 %v132
    %287 = vmatpush.msra.mxu0 %v131
    %288 = vmatpush.msra.mxu0 %v130
    %289 = vmatmul.f32.gmra.mxu0 %v271
    %v290 = vpop.f32.mrf.mxu0
    %v291 = vadd.f32 0.0, %v290
    %292 = vdwg.mxu0
    %v294 = vrot.slane %v291, 4
    %v296 = vadd.f32 %v120, %v294
    %v297 = vtanh.pop %v296
    %v298 = vxor.u32 %v296, 2147483648
    %v299 = vmul.f32 %v298, 1.442695
    %v300 = vpow.pop %v299
    %v301 = vadd.f32 %v300, 1.0
    %v302 = vrcp.pop %v301
    %v303 = vmul.f32 %v301, %v302
    %v304 = vsub.f32 1.0, %v303
    %v305 = vmul.f32 %v302, %v304
    %v306 = vadd.f32 %v302, %v305
    %vm307 = vweird.f32 %v301
    %vm308 = vweird.f32 %v302
    %vm309 = vmor %vm307, %vm308
    %v310 = vsel %vm309, %v302, %v306
    %v311 = vand.u32 2147483647, %v301
    %vm312 = vcmp.eq.f32.partialorder %v311, 8.507059e+37
    %v313 = vand.u32 %v301, 2147483648
    %v314 = vor.u32 1.1754944e-38, %v313
    %v315 = vsel %vm312, %v314, %v310
    %v316 = vmul.f32 1.0, %v315
    %v317 = vsel %vm129, %v297, %v316
    %v319 = vrot.slane %v260, 6
    %v321 = vmul.f32 %v317, %v319
    %323 = vrot.lane.b32.xlu0 %v317, 64
    %v324 = vpop.permute.xlu0 %323
    %v326 = vmul.f32 %v317, %v324
    %328 = vrot.lane.b32.xlu0 %v326, 32
    %v329 = vpop.permute.xlu0 %328
    %v331 = vadd.f32 %v321, %v329
    %v332 = vtanh.pop %v331
    %334 = vrot.lane.b32.xlu0 %v332, 64
    %v335 = vpop.permute.xlu0 %334
    %v337 = vmul.f32 %v317, %v335
    %v339 = vrot.slane %v337, 4
    %340 = vrot.lane.b32.xlu0 %v339, 32
    %v341 = vpop.permute.xlu0 %340
    %v342 = vsel %vm134, %v341, 0
    %344 = vmatpush.msra.mxu0 0.0
    %345 = vmatpush.msra.mxu0 0.0
    %346 = vmatpush.msra.mxu0 0.0
    %347 = vmatpush.msra.mxu0 0.0
    %348 = vmatpush.msra.mxu0 0.0
    %349 = vmatpush.msra.mxu0 0.0
    %350 = vmatpush.msra.mxu0 0.0
    %351 = vmatpush.msra.mxu0 0.0
    %352 = vmatpush.msra.mxu0 0.0
    %353 = vmatpush.msra.mxu0 0.0
    %354 = vmatpush.msra.mxu0 0.0
    %355 = vmatpush.msra.mxu0 0.0
    %356 = vmatpush.msra.mxu0 %v133
    %357 = vmatpush.msra.mxu0 %v132
    %358 = vmatpush.msra.mxu0 %v131
    %359 = vmatpush.msra.mxu0 %v130
    %360 = vmatmul.f32.gmra.mxu0 %v342
    %v361 = vpop.f32.mrf.mxu0
    %v362 = vadd.f32 0.0, %v361
    %363 = vdwg.mxu0
    %v365 = vrot.slane %v362, 2
    %v367 = vadd.f32 %v120, %v365
    %v368 = vtanh.pop %v367
    %v369 = vxor.u32 %v367, 2147483648
    %v370 = vmul.f32 %v369, 1.442695
    %v371 = vpow.pop %v370
    %v372 = vadd.f32 %v371, 1.0
    %v373 = vrcp.pop %v372
    %v374 = vmul.f32 %v372, %v373
    %v375 = vsub.f32 1.0, %v374
    %v376 = vmul.f32 %v373, %v375
    %v377 = vadd.f32 %v373, %v376
    %vm378 = vweird.f32 %v372
    %vm379 = vweird.f32 %v373
    %vm380 = vmor %vm378, %vm379
    %v381 = vsel %vm380, %v373, %v377
    %v382 = vand.u32 2147483647, %v372
    %vm383 = vcmp.eq.f32.partialorder %v382, 8.507059e+37
    %v384 = vand.u32 %v372, 2147483648
    %v385 = vor.u32 1.1754944e-38, %v384
    %v386 = vsel %vm383, %v385, %v381
    %v387 = vmul.f32 1.0, %v386
    %v388 = vsel %vm129, %v368, %v387
    %v390 = vrot.slane %v331, 6
    %v392 = vmul.f32 %v388, %v390
    %394 = vrot.lane.b32.xlu0 %v388, 64
    %v395 = vpop.permute.xlu0 %394
    %v397 = vmul.f32 %v388, %v395
    %399 = vrot.lane.b32.xlu0 %v397, 32
    %v400 = vpop.permute.xlu0 %399
    %v402 = vadd.f32 %v392, %v400
    %v403 = vtanh.pop %v402
    %405 = vrot.lane.b32.xlu0 %v403, 64
    %v406 = vpop.permute.xlu0 %405
    %v408 = vmul.f32 %v388, %v406
    %v410 = vrot.slane %v408, 6
    %411 = vrot.lane.b32.xlu0 %v410, 32
    %v412 = vpop.permute.xlu0 %411
    %v413 = vsel %vm134, %v412, 0
    %415 = vmatpush.msra.mxu0 0.0
    %416 = vmatpush.msra.mxu0 0.0
    %417 = vmatpush.msra.mxu0 0.0
    %418 = vmatpush.msra.mxu0 0.0
    %419 = vmatpush.msra.mxu0 0.0
    %420 = vmatpush.msra.mxu0 0.0
    %421 = vmatpush.msra.mxu0 0.0
    %422 = vmatpush.msra.mxu0 0.0
    %423 = vmatpush.msra.mxu0 0.0
    %424 = vmatpush.msra.mxu0 0.0
    %425 = vmatpush.msra.mxu0 0.0
    %426 = vmatpush.msra.mxu0 0.0
    %427 = vmatpush.msra.mxu0 %v133
    %428 = vmatpush.msra.mxu0 %v132
    %429 = vmatpush.msra.mxu0 %v131
    %430 = vmatpush.msra.mxu0 %v130
    %431 = vmatmul.f32.gmra.mxu0 %v413
    %v432 = vpop.f32.mrf.mxu0
    %v433 = vadd.f32 0.0, %v432
    %434 = vdwg.mxu0
    %v435 = vadd.f32 %v123, %v433
    %v436 = vtanh.pop %v435
    %v437 = vxor.u32 %v435, 2147483648
    %v438 = vmul.f32 %v437, 1.442695
    %v439 = vpow.pop %v438
    %v440 = vadd.f32 %v439, 1.0
    %v441 = vrcp.pop %v440
    %v442 = vmul.f32 %v440, %v441
    %v443 = vsub.f32 1.0, %v442
    %v444 = vmul.f32 %v441, %v443
    %v445 = vadd.f32 %v441, %v444
    %vm446 = vweird.f32 %v440
    %vm447 = vweird.f32 %v441
    %vm448 = vmor %vm446, %vm447
    %v449 = vsel %vm448, %v441, %v445
    %v450 = vand.u32 2147483647, %v440
    %vm451 = vcmp.eq.f32.partialorder %v450, 8.507059e+37
    %v452 = vand.u32 %v440, 2147483648
    %v453 = vor.u32 1.1754944e-38, %v452
    %v454 = vsel %vm451, %v453, %v449
    %v455 = vmul.f32 1.0, %v454
    %v456 = vsel %vm129, %v436, %v455
    %v458 = vrot.slane %v402, 6
    %v460 = vmul.f32 %v456, %v458
    %462 = vrot.lane.b32.xlu0 %v456, 64
    %v463 = vpop.permute.xlu0 %462
    %v465 = vmul.f32 %v456, %v463
    %467 = vrot.lane.b32.xlu0 %v465, 32
    %v468 = vpop.permute.xlu0 %467
    %v470 = vadd.f32 %v460, %v468
    %v471 = vtanh.pop %v470
    %473 = vrot.lane.b32.xlu0 %v471, 64
    %v474 = vpop.permute.xlu0 %473
    %v476 = vmul.f32 %v456, %v474
    %478 = vrot.lane.b32.xlu0 %v476, 32
    %v479 = vpop.permute.xlu0 %478
    %v480 = vsel %vm134, %v479, 0
    %482 = vmatpush.msra.mxu0 0.0
    %483 = vmatpush.msra.mxu0 0.0
    %484 = vmatpush.msra.mxu0 0.0
    %485 = vmatpush.msra.mxu0 0.0
    %486 = vmatpush.msra.mxu0 0.0
    %487 = vmatpush.msra.mxu0 0.0
    %488 = vmatpush.msra.mxu0 0.0
    %489 = vmatpush.msra.mxu0 0.0
    %490 = vmatpush.msra.mxu0 0.0
    %491 = vmatpush.msra.mxu0 0.0
    %492 = vmatpush.msra.mxu0 0.0
    %493 = vmatpush.msra.mxu0 0.0
    %494 = vmatpush.msra.mxu0 %v133
    %495 = vmatpush.msra.mxu0 %v132
    %496 = vmatpush.msra.mxu0 %v131
    %497 = vmatpush.msra.mxu0 %v130
    %498 = vmatmul.f32.gmra.mxu0 %v480
    %v499 = vpop.f32.mrf.mxu0
    %v500 = vadd.f32 0.0, %v499
    %501 = vdwg.mxu0
    %v503 = vrot.slane %v500, 6
    %v505 = vadd.f32 %v123, %v503
    %v506 = vtanh.pop %v505
    %v507 = vxor.u32 %v505, 2147483648
    %v508 = vmul.f32 %v507, 1.442695
    %v509 = vpow.pop %v508
    %v510 = vadd.f32 %v509, 1.0
    %v511 = vrcp.pop %v510
    %v512 = vmul.f32 %v510, %v511
    %v513 = vsub.f32 1.0, %v512
    %v514 = vmul.f32 %v511, %v513
    %v515 = vadd.f32 %v511, %v514
    %vm516 = vweird.f32 %v510
    %vm517 = vweird.f32 %v511
    %vm518 = vmor %vm516, %vm517
    %v519 = vsel %vm518, %v511, %v515
    %v520 = vand.u32 2147483647, %v510
    %vm521 = vcmp.eq.f32.partialorder %v520, 8.507059e+37
    %v522 = vand.u32 %v510, 2147483648
    %v523 = vor.u32 1.1754944e-38, %v522
    %v524 = vsel %vm521, %v523, %v519
    %v525 = vmul.f32 1.0, %v524
    %v526 = vsel %vm129, %v506, %v525
    %v528 = vrot.slane %v470, 6
    %v530 = vmul.f32 %v526, %v528
    %532 = vrot.lane.b32.xlu0 %v526, 64
    %v533 = vpop.permute.xlu0 %532
    %v535 = vmul.f32 %v526, %v533
    %537 = vrot.lane.b32.xlu0 %v535, 32
    %v538 = vpop.permute.xlu0 %537
    %v540 = vadd.f32 %v530, %v538
    %v541 = vtanh.pop %v540
    %543 = vrot.lane.b32.xlu0 %v541, 64
    %v544 = vpop.permute.xlu0 %543
    %v546 = vmul.f32 %v526, %v544
    %v548 = vrot.slane %v546, 2
    %549 = vrot.lane.b32.xlu0 %v548, 32
    %v550 = vpop.permute.xlu0 %549
    %v551 = vsel %vm134, %v550, 0
    %553 = vmatpush.msra.mxu0 0.0
    %554 = vmatpush.msra.mxu0 0.0
    %555 = vmatpush.msra.mxu0 0.0
    %556 = vmatpush.msra.mxu0 0.0
    %557 = vmatpush.msra.mxu0 0.0
    %558 = vmatpush.msra.mxu0 0.0
    %559 = vmatpush.msra.mxu0 0.0
    %560 = vmatpush.msra.mxu0 0.0
    %561 = vmatpush.msra.mxu0 0.0
    %562 = vmatpush.msra.mxu0 0.0
    %563 = vmatpush.msra.mxu0 0.0
    %564 = vmatpush.msra.mxu0 0.0
    %565 = vmatpush.msra.mxu0 %v133
    %566 = vmatpush.msra.mxu0 %v132
    %567 = vmatpush.msra.mxu0 %v131
    %568 = vmatpush.msra.mxu0 %v130
    %569 = vmatmul.f32.gmra.mxu0 %v551
    %v570 = vpop.f32.mrf.mxu0
    %v571 = vadd.f32 0.0, %v570
    %572 = vdwg.mxu0
    %v574 = vrot.slane %v571, 4
    %v576 = vadd.f32 %v123, %v574
    %v577 = vtanh.pop %v576
    %v578 = vxor.u32 %v576, 2147483648
    %v579 = vmul.f32 %v578, 1.442695
    %v580 = vpow.pop %v579
    %v581 = vadd.f32 %v580, 1.0
    %v582 = vrcp.pop %v581
    %v583 = vmul.f32 %v581, %v582
    %v584 = vsub.f32 1.0, %v583
    %v585 = vmul.f32 %v582, %v584
    %v586 = vadd.f32 %v582, %v585
    %vm587 = vweird.f32 %v581
    %vm588 = vweird.f32 %v582
    %vm589 = vmor %vm587, %vm588
    %v590 = vsel %vm589, %v582, %v586
    %v591 = vand.u32 2147483647, %v581
    %vm592 = vcmp.eq.f32.partialorder %v591, 8.507059e+37
    %v593 = vand.u32 %v581, 2147483648
    %v594 = vor.u32 1.1754944e-38, %v593
    %v595 = vsel %vm592, %v594, %v590
    %v596 = vmul.f32 1.0, %v595
    %v597 = vsel %vm129, %v577, %v596
    %v599 = vrot.slane %v540, 6
    %v601 = vmul.f32 %v597, %v599
    %603 = vrot.lane.b32.xlu0 %v597, 64
    %v604 = vpop.permute.xlu0 %603
    %v606 = vmul.f32 %v597, %v604
    %608 = vrot.lane.b32.xlu0 %v606, 32
    %v609 = vpop.permute.xlu0 %608
    %v611 = vadd.f32 %v601, %v609
    %v612 = vtanh.pop %v611
    %614 = vrot.lane.b32.xlu0 %v612, 64
    %v615 = vpop.permute.xlu0 %614
    %v617 = vmul.f32 %v597, %v615
    %v619 = vrot.slane %v617, 4
    %620 = vrot.lane.b32.xlu0 %v619, 32
    %v621 = vpop.permute.xlu0 %620
    %v622 = vsel %vm134, %v621, 0
    %624 = vmatpush.msra.mxu0 0.0
    %625 = vmatpush.msra.mxu0 0.0
    %626 = vmatpush.msra.mxu0 0.0
    %627 = vmatpush.msra.mxu0 0.0
    %628 = vmatpush.msra.mxu0 0.0
    %629 = vmatpush.msra.mxu0 0.0
    %630 = vmatpush.msra.mxu0 0.0
    %631 = vmatpush.msra.mxu0 0.0
    %632 = vmatpush.msra.mxu0 0.0
    %633 = vmatpush.msra.mxu0 0.0
    %634 = vmatpush.msra.mxu0 0.0
    %635 = vmatpush.msra.mxu0 0.0
    %636 = vmatpush.msra.mxu0 %v133
    %637 = vmatpush.msra.mxu0 %v132
    %638 = vmatpush.msra.mxu0 %v131
    %639 = vmatpush.msra.mxu0 %v130
    %640 = vmatmul.f32.gmra.mxu0 %v622
    %v641 = vpop.f32.mrf.mxu0
    %v642 = vadd.f32 0.0, %v641
    %643 = vdwg.mxu0
    %v645 = vrot.slane %v642, 2
    %v647 = vadd.f32 %v123, %v645
    %v648 = vtanh.pop %v647
    %v649 = vxor.u32 %v647, 2147483648
    %v650 = vmul.f32 %v649, 1.442695
    %v651 = vpow.pop %v650
    %v652 = vadd.f32 %v651, 1.0
    %v653 = vrcp.pop %v652
    %v654 = vmul.f32 %v652, %v653
    %v655 = vsub.f32 1.0, %v654
    %v656 = vmul.f32 %v653, %v655
    %v657 = vadd.f32 %v653, %v656
    %vm658 = vweird.f32 %v652
    %vm659 = vweird.f32 %v653
    %vm660 = vmor %vm658, %vm659
    %v661 = vsel %vm660, %v653, %v657
    %v662 = vand.u32 2147483647, %v652
    %vm663 = vcmp.eq.f32.partialorder %v662, 8.507059e+37
    %v664 = vand.u32 %v652, 2147483648
    %v665 = vor.u32 1.1754944e-38, %v664
    %v666 = vsel %vm663, %v665, %v661
    %v667 = vmul.f32 1.0, %v666
    %v668 = vsel %vm129, %v648, %v667
    %v670 = vrot.slane %v611, 6
    %v672 = vmul.f32 %v668, %v670
    %674 = vrot.lane.b32.xlu0 %v668, 64
    %v675 = vpop.permute.xlu0 %674
    %v677 = vmul.f32 %v668, %v675
    %679 = vrot.lane.b32.xlu0 %v677, 32
    %v680 = vpop.permute.xlu0 %679
    %v682 = vadd.f32 %v672, %v680
    %v683 = vtanh.pop %v682
    %685 = vrot.lane.b32.xlu0 %v683, 64
    %v686 = vpop.permute.xlu0 %685
    %v688 = vmul.f32 %v668, %v686
    %v689 = vld [vmem:[#allocation8] sm:$0xff]
    %v690 = vld [vmem:[#allocation8 + $0x8] sm:$0xff]
    %v691 = vld [vmem:[#allocation8 + $0x10] sm:$0xff]
    %v692 = vld [vmem:[#allocation8 + $0x18] sm:$0xff]
    %v693 = vld [vmem:[%s5] sm:$0x1]
    %v695 = vperm.slane %v693, 0
    %v698 = vrot.slane %v688, 6
    %699 = vrot.lane.b32.xlu0 %v698, 32
    %v700 = vpop.permute.xlu0 %699
    %v701 = vsel %vm134, %v700, 0
    %703 = vmatpush.msra.mxu0 0.0
    %704 = vmatpush.msra.mxu0 0.0
    %705 = vmatpush.msra.mxu0 0.0
    %706 = vmatpush.msra.mxu0 0.0
    %707 = vmatpush.msra.mxu0 0.0
    %708 = vmatpush.msra.mxu0 0.0
    %709 = vmatpush.msra.mxu0 0.0
    %710 = vmatpush.msra.mxu0 0.0
    %711 = vmatpush.msra.mxu0 0.0
    %712 = vmatpush.msra.mxu0 0.0
    %713 = vmatpush.msra.mxu0 0.0
    %714 = vmatpush.msra.mxu0 0.0
    %715 = vmatpush.msra.mxu0 %v692
    %716 = vmatpush.msra.mxu0 %v691
    %717 = vmatpush.msra.mxu0 %v690
    %718 = vmatpush.msra.mxu0 %v689
    %719 = vmatmul.f32.gmra.mxu0 %v701
    %v720 = vpop.f32.mrf.mxu0
    %v721 = vadd.f32 %v695, %v720
    %722 = vdwg.mxu0
    %723 = vst [vmem:[#allocation10] sm:$0x3] %v721
    // Predicated region
    $region42: #{tpu_custom_call.1} parent=1 // pred_check
      _
    $region43: #{tpu_custom_call.1} parent=1 // pred_check_branch
      %725 = sbr.rel (0) target = $region45
    $region44: #{tpu_custom_call.1} parent=1 // pred_region
      %727 = vsyncadd [#allocation4], 0
      %s729 = sshll.u32 [#allocation10], 4
      %s730 = int_to_ptr.vmem [resolvable:$true] %s729
      %s731 = sshll.u32 %s6, 4
      %s732 = int_to_ptr.hbm [resolvable:$true] %s731
      %734 = dma.vmem_to_hbm [thread:$0]  %s730, 32, %s732, [#allocation4]
    $region45: #{tpu_custom_call.1} parent=1 // pred_fallthru
      _
    // Predicated region
    $region46: #{tpu_custom_call.1} parent=1 // pred_check
      _
    $region47: #{tpu_custom_call.1} parent=1 // pred_check_branch
      %736 = sbr.rel (0) target = $region49
    $region48: #{tpu_custom_call.1} parent=1 // pred_region
      %738 = dma.done [#allocation4], 32
    $region49: #{tpu_custom_call.1} parent=1 // pred_fallthru
      _
    %739 = vsyncpa [#allocation3], 1
    %740 = vsyncpa [#allocation6], 1
    %741 = vsyncpa [#allocation9], 1
    %742 = vsyncpa [#allocation4], 1

</llo_original>
